<compile_context>
chip_gen: v5e
topology: v5e:2x2
jax: 0.10.0
libtpu: 0.0.40
codegen_flags: <defaults>
</compile_context>

<pallas_src>
import jax
import jax.numpy as jnp
from jax.experimental import pallas as pl
from jax.experimental.pallas import tpu as pltpu


# ----------------------------- small helpers --------------------------------

def _round_up(x, m):
    return ((x + m - 1) // m) * m


def _cdiv(a, b):
    return -(-a // b)


def _device_kind():
    try:
        return jax.devices()[0].device_kind.lower()
    except Exception:
        return ""


def _default_block_b():
    kind = _device_kind()
    # v5e's MXU is 128x128 -> a 128-row tile already saturates its M dimension;
    # v6e/v7x have 256-wide MXUs, so prefer 256-row batch tiles there.
    if "v5 lite" in kind or "v5lite" in kind or "v5e" in kind:
        return 128
    return 256


def _min_batch_tiles():
    # v7x has two TensorCores per chip: the batch grid needs >=2 steps for
    # dimension_semantics=("parallel",) to shard work across both cores.
    return 2 if "v7" in _device_kind() else 1


def _pick_batch_tile(B, block_b, min_tiles):
    """Pick (TB, Bp): tile rows (multiple of 8) and padded batch, minimizing padding."""
    Ba = _round_up(max(B, 8), 8)
    n_tiles = max(_cdiv(Ba, block_b), min_tiles)
    n_tiles = max(1, min(n_tiles, Ba // 8))          # every tile at least 8 rows
    TB = _round_up(_cdiv(Ba, n_tiles), 8)
    Bp = _round_up(Ba, TB)
    return TB, Bp


# --------------------------- one-time param prep -----------------------------

def prepare_params(hidden_w, hidden_b, logits_w, logits_b):
    """One-time parameter prep (call once; reuse the result for every forward).

    hidden_w: (L, D, D) f32, PyTorch (out, in) layout.  hidden_b: (L, D).
    logits_w: (K, D) f32 (out, in).                     logits_b: (K,).
    Returns kernel-ready arrays:
      wh: (L, D, D) bf16 in (in, out) layout         bh: (L, D)  f32
      wl: (D, Kp)   bf16 in (in, out), zero-padded   bl: (1, Kp) f32, zero-padded
    """
    L, D, _ = hidden_w.shape
    K = logits_w.shape[0]
    Kp = _round_up(max(K, 128), 128)                   # lane-dense logits/output store
    # Fuse the bf16 cast with the transpose -> kernel uses standard k-major contraction.
    wh = jnp.transpose(hidden_w, (0, 2, 1)).astype(jnp.bfloat16)
    bh = hidden_b.astype(jnp.float32)
    wl = jnp.zeros((D, Kp), jnp.bfloat16).at[:, :K].set(logits_w.T.astype(jnp.bfloat16))
    bl = jnp.zeros((1, Kp), jnp.float32).at[0, :K].set(logits_b.astype(jnp.float32))
    return dict(wh=wh, bh=bh, wl=wl, bl=bl, L=L, D=D, K=K, Kp=Kp)


# -------------------------------- kernels ------------------------------------

def mlp_resident_kernel(x_ref, wh_ref, bh_ref, wl_ref, bl_ref, o_ref):
    """Whole layer stack resident in VMEM; one batch tile per grid step.

    x_ref : (TB, D)   bf16 activations
    wh_ref: (L, D, D) bf16 hidden weights, (in, out) layout
    bh_ref: (L, D)    f32  hidden biases
    wl_ref: (D, Kp)   bf16 logits weight, (in, out), zero-padded
    bl_ref: (1, Kp)   f32  logits bias, zero-padded
    o_ref : (TB, Kp)  output tile
    """
    h = x_ref[...]                                          # bf16
    L = wh_ref.shape[0]
    for l in range(L):                                      # small L -> fully unrolled
        z = jnp.dot(h, wh_ref[l], preferred_element_type=jnp.float32)
        h = (z + bh_ref[pl.ds(l, 1), :]).astype(jnp.bfloat16)
    out = jnp.dot(h, wl_ref[...], preferred_element_type=jnp.float32)
    o_ref[...] = (out + bl_ref[...]).astype(o_ref.dtype)


def mlp_stream_kernel(x_ref, wh_ref, bh_ref, wl_ref, bl_ref, o_ref, h_ref):
    """Layer-streaming variant: grid=(batch_tiles, L); one (1, D, D) weight block per
    step, h carried in a bf16 VMEM scratch, output written on the last layer step."""
    l = pl.program_id(1)

    @pl.when(l == 0)
    def _():
        h_ref[...] = x_ref[...]

    z = jnp.dot(h_ref[...], wh_ref[0], preferred_element_type=jnp.float32)
    h_ref[...] = (z + bh_ref[...]).astype(jnp.bfloat16)

    @pl.when(l == pl.num_programs(1) - 1)
    def _():
        out = jnp.dot(h_ref[...], wl_ref[...], preferred_element_type=jnp.float32)
        o_ref[...] = (out + bl_ref[...]).astype(o_ref.dtype)


# -------------------------------- wrapper ------------------------------------

# Resident-weight path is used while its (conservatively double-buffered) working set
# stays under this budget; above it we stream one layer at a time (fits v7x 64 MiB/core).
_RESIDENT_VMEM_BUDGET = 40 << 20


def testnet2_forward(x, params, *, block_b=None, force_stream=False):
    """x: (B, D) -> (B, K) logits in x.dtype.  `params` comes from prepare_params."""
    wh, bh, wl, bl = params["wh"], params["bh"], params["wl"], params["bl"]
    L, D, K, Kp = params["L"], params["D"], params["K"], params["Kp"]
    B = x.shape[0]
    out_dtype = x.dtype
    osize = jnp.dtype(out_dtype).itemsize

    if block_b is None:
        block_b = _default_block_b()
    TB, Bp = _pick_batch_tile(B, block_b, _min_batch_tiles())
    nb = Bp // TB

    # Only per-grid-step streamed bytes: bf16 x tile in, logits tile out.
    xp = x.astype(jnp.bfloat16)
    if Bp != B:
        xp = jnp.pad(xp, ((0, Bp - B), (0, 0)))

    bytes_io = TB * D * 2 + TB * Kp * osize                        # one buffer each
    bytes_weights = (wh.size + wl.size) * 2 + (bh.size + bl.size) * 4
    resident_need = 2 * bytes_io + 2 * bytes_weights               # conservative (x2)
    use_stream = force_stream or resident_need > _RESIDENT_VMEM_BUDGET

    if not use_stream:
        vmem_limit = int(min(max(resident_need + (2 << 20), 8 << 20), 64 << 20))
        out = pl.pallas_call(
            mlp_resident_kernel,
            out_shape=jax.ShapeDtypeStruct((Bp, Kp), out_dtype),
            grid=(nb,),
            in_specs=[
                pl.BlockSpec((TB, D), lambda i: (i, 0)),        # x: tiled over batch
                pl.BlockSpec((L, D, D), lambda i: (0, 0, 0)),   # weights resident
                pl.BlockSpec((L, D), lambda i: (0, 0)),
                pl.BlockSpec((D, Kp), lambda i: (0, 0)),
                pl.BlockSpec((1, Kp), lambda i: (0, 0)),
            ],
            out_specs=pl.BlockSpec((TB, Kp), lambda i: (i, 0)),
            compiler_params=pltpu.CompilerParams(
                dimension_semantics=("parallel",),              # shards batch on v7x
                vmem_limit_bytes=vmem_limit),
        )(xp, wh, bh, wl, bl)
    else:
        per_layer = D * D * 2 + D * 4
        stream_need = (2 * bytes_io + 2 * per_layer
                       + 2 * (D * Kp * 2 + Kp * 4) + TB * D * 2)
        vmem_limit = int(min(max(stream_need + (2 << 20), 8 << 20), 64 << 20))
        out = pl.pallas_call(
            mlp_stream_kernel,
            out_shape=jax.ShapeDtypeStruct((Bp, Kp), out_dtype),
            grid=(nb, L),
            in_specs=[
                pl.BlockSpec((TB, D), lambda i, l: (i, 0)),
                pl.BlockSpec((1, D, D), lambda i, l: (l, 0, 0)),  # stream layer l
                pl.BlockSpec((1, D), lambda i, l: (l, 0)),
                pl.BlockSpec((D, Kp), lambda i, l: (0, 0)),
                pl.BlockSpec((1, Kp), lambda i, l: (0, 0)),
            ],
            out_specs=pl.BlockSpec((TB, Kp), lambda i, l: (i, 0)),
            scratch_shapes=[pltpu.VMEM((TB, D), jnp.bfloat16)],   # carried activations
            compiler_params=pltpu.CompilerParams(
                dimension_semantics=("parallel", "arbitrary"),
                vmem_limit_bytes=vmem_limit),
        )(xp, wh, bh, wl, bl)

    return out[:B, :K]


def testnet2_reference(x, hidden_w, hidden_b, logits_w, logits_b):
    h = x.astype(jnp.float32)
    for l in range(hidden_w.shape[0]):
        h = h @ hidden_w[l].T + hidden_b[l]
    return h @ logits_w.T + logits_b


if __name__ == "__main__":
    # Module structure: L x Linear(D, D) then Linear(D, K).  Small, MXU-friendly shapes.
    B, D, K, L = 24, 128, 10, 5

    key = jax.random.PRNGKey(0)
    k_x, k_w, k_b, k_lw, k_lb = jax.random.split(key, 5)

    x = jax.random.normal(k_x, (B, D), dtype=jnp.float32)
    # Weights ~ U(-1, 1) as in the module; biases ~ torch Linear default U(+-1/sqrt(D)).
    hidden_w = jax.random.uniform(k_w, (L, D, D), minval=-1.0, maxval=1.0,
                                  dtype=jnp.float32)
    hidden_b = jax.random.uniform(k_b, (L, D), minval=-1.0 / jnp.sqrt(D),
                                  maxval=1.0 / jnp.sqrt(D), dtype=jnp.float32)
    logits_w = jax.random.uniform(k_lw, (K, D), minval=-1.0, maxval=1.0,
                                  dtype=jnp.float32)
    logits_b = jax.random.uniform(k_lb, (K,), minval=-1.0 / jnp.sqrt(D),
                                  maxval=1.0 / jnp.sqrt(D), dtype=jnp.float32)

    # One-time prep (bf16 cast + transpose + Kp padding) -- reused for every forward.
    params = prepare_params(hidden_w, hidden_b, logits_w, logits_b)
    ref = testnet2_reference(x, hidden_w, hidden_b, logits_w, logits_b)

    def check(out, name):
        out = jax.block_until_ready(out)
        assert out.shape == (B, K), (name, out.shape)
        # bf16 matmul operands (f32 accumulation) -> normalized max-error bound; note
        # the bf16 carry compounds across the L layers (documented mixed-precision choice).
        rel = jnp.max(jnp.abs(out - ref)) / (jnp.max(jnp.abs(ref)) + 1e-6)
        assert rel < 3e-2, f"{name}: mismatch vs reference (rel_err={rel})"

    # 1) Weight-resident path with the generation-default batch tile.
    check(testnet2_forward(x, params), "resident")
    # 2) Layer-streaming path (auto-selected when L*D*D is too big for VMEM); forced here
    #    with small batch tiles so both kernels are compiled and verified.
    check(testnet2_forward(x, params, block_b=8, force_stream=True), "stream")

    print("KERNEL_OK")
</pallas_src>

<mosaic_0001>
module attributes {stable_mosaic.version = 11 : i64} {
  func.func @mlp_resident_kernel(%arg0: i32, %arg1: memref<24x128xbf16, #tpu.memory_space<vmem>>, %arg2: memref<5x128x128xbf16, #tpu.memory_space<vmem>>, %arg3: memref<5x128xf32, #tpu.memory_space<vmem>>, %arg4: memref<128x128xbf16, #tpu.memory_space<vmem>>, %arg5: memref<1x128xf32, #tpu.memory_space<vmem>>, %arg6: memref<24x128xf32, #tpu.memory_space<vmem>>) attributes {dimension_semantics = [#tpu.dimension_semantics<parallel>], iteration_bounds = array<i64: 1>, scalar_prefetch = 0 : i64, scratch_operands = 0 : i64, tpu.core_type = #tpu.core_type<tc>, window_params = [{transform_indices = @transform_0, window_bounds = array<i64: 24, 128>}, {pipeline_mode = #tpu.pipeline_mode<synchronous>, transform_indices = @transform_1, window_bounds = array<i64: 5, 128, 128>}, {pipeline_mode = #tpu.pipeline_mode<synchronous>, transform_indices = @transform_2, window_bounds = array<i64: 5, 128>}, {pipeline_mode = #tpu.pipeline_mode<synchronous>, transform_indices = @transform_3, window_bounds = array<i64: 128, 128>}, {pipeline_mode = #tpu.pipeline_mode<synchronous>, transform_indices = @transform_4, window_bounds = array<i64: 1, 128>}, {transform_indices = @transform_5, window_bounds = array<i64: 24, 128>}]} {
    %c0 = arith.constant 0 : index
    %c0_0 = arith.constant 0 : index
    %0 = vector.load %arg1[%c0, %c0_0] : memref<24x128xbf16, #tpu.memory_space<vmem>>, vector<24x128xbf16>
    %c0_1 = arith.constant 0 : index
    %c0_2 = arith.constant 0 : index
    %c0_3 = arith.constant 0 : index
    %1 = vector.load %arg2[%c0_1, %c0_2, %c0_3] : memref<5x128x128xbf16, #tpu.memory_space<vmem>>, vector<1x128x128xbf16>
    %2 = vector.shape_cast %1 : vector<1x128x128xbf16> to vector<128x128xbf16>
    %cst = arith.constant dense<0.000000e+00> : vector<24x128xf32>
    %3 = tpu.matmul %0, %2, %cst {dimension_numbers = #tpu.dot_dimension_numbers<[1], [0], [0], [1], [0, 0, 1, 1], [], []>} : vector<24x128xbf16>, vector<128x128xbf16>, vector<24x128xf32> -> vector<24x128xf32>
    %c0_4 = arith.constant 0 : index
    %c0_5 = arith.constant 0 : index
    %4 = vector.load %arg3[%c0_4, %c0_5] : memref<5x128xf32, #tpu.memory_space<vmem>>, vector<1x128xf32>
    %5 = vector.broadcast %4 : vector<1x128xf32> to vector<24x128xf32>
    %6 = arith.addf %3, %5 : vector<24x128xf32>
    %7 = arith.truncf %6 : vector<24x128xf32> to vector<24x128xbf16>
    %c1 = arith.constant 1 : index
    %c0_6 = arith.constant 0 : index
    %c0_7 = arith.constant 0 : index
    %8 = vector.load %arg2[%c1, %c0_6, %c0_7] : memref<5x128x128xbf16, #tpu.memory_space<vmem>>, vector<1x128x128xbf16>
    %9 = vector.shape_cast %8 : vector<1x128x128xbf16> to vector<128x128xbf16>
    %cst_8 = arith.constant dense<0.000000e+00> : vector<24x128xf32>
    %10 = tpu.matmul %7, %9, %cst_8 {dimension_numbers = #tpu.dot_dimension_numbers<[1], [0], [0], [1], [0, 0, 1, 1], [], []>} : vector<24x128xbf16>, vector<128x128xbf16>, vector<24x128xf32> -> vector<24x128xf32>
    %c1_9 = arith.constant 1 : index
    %c0_10 = arith.constant 0 : index
    %11 = vector.load %arg3[%c1_9, %c0_10] : memref<5x128xf32, #tpu.memory_space<vmem>>, vector<1x128xf32>
    %12 = vector.broadcast %11 : vector<1x128xf32> to vector<24x128xf32>
    %13 = arith.addf %10, %12 : vector<24x128xf32>
    %14 = arith.truncf %13 : vector<24x128xf32> to vector<24x128xbf16>
    %c2 = arith.constant 2 : index
    %c0_11 = arith.constant 0 : index
    %c0_12 = arith.constant 0 : index
    %15 = vector.load %arg2[%c2, %c0_11, %c0_12] : memref<5x128x128xbf16, #tpu.memory_space<vmem>>, vector<1x128x128xbf16>
    %16 = vector.shape_cast %15 : vector<1x128x128xbf16> to vector<128x128xbf16>
    %cst_13 = arith.constant dense<0.000000e+00> : vector<24x128xf32>
    %17 = tpu.matmul %14, %16, %cst_13 {dimension_numbers = #tpu.dot_dimension_numbers<[1], [0], [0], [1], [0, 0, 1, 1], [], []>} : vector<24x128xbf16>, vector<128x128xbf16>, vector<24x128xf32> -> vector<24x128xf32>
    %c2_14 = arith.constant 2 : index
    %c0_15 = arith.constant 0 : index
    %18 = vector.load %arg3[%c2_14, %c0_15] : memref<5x128xf32, #tpu.memory_space<vmem>>, vector<1x128xf32>
    %19 = vector.broadcast %18 : vector<1x128xf32> to vector<24x128xf32>
    %20 = arith.addf %17, %19 : vector<24x128xf32>
    %21 = arith.truncf %20 : vector<24x128xf32> to vector<24x128xbf16>
    %c3 = arith.constant 3 : index
    %c0_16 = arith.constant 0 : index
    %c0_17 = arith.constant 0 : index
    %22 = vector.load %arg2[%c3, %c0_16, %c0_17] : memref<5x128x128xbf16, #tpu.memory_space<vmem>>, vector<1x128x128xbf16>
    %23 = vector.shape_cast %22 : vector<1x128x128xbf16> to vector<128x128xbf16>
    %cst_18 = arith.constant dense<0.000000e+00> : vector<24x128xf32>
    %24 = tpu.matmul %21, %23, %cst_18 {dimension_numbers = #tpu.dot_dimension_numbers<[1], [0], [0], [1], [0, 0, 1, 1], [], []>} : vector<24x128xbf16>, vector<128x128xbf16>, vector<24x128xf32> -> vector<24x128xf32>
    %c3_19 = arith.constant 3 : index
    %c0_20 = arith.constant 0 : index
    %25 = vector.load %arg3[%c3_19, %c0_20] : memref<5x128xf32, #tpu.memory_space<vmem>>, vector<1x128xf32>
    %26 = vector.broadcast %25 : vector<1x128xf32> to vector<24x128xf32>
    %27 = arith.addf %24, %26 : vector<24x128xf32>
    %28 = arith.truncf %27 : vector<24x128xf32> to vector<24x128xbf16>
    %c4 = arith.constant 4 : index
    %c0_21 = arith.constant 0 : index
    %c0_22 = arith.constant 0 : index
    %29 = vector.load %arg2[%c4, %c0_21, %c0_22] : memref<5x128x128xbf16, #tpu.memory_space<vmem>>, vector<1x128x128xbf16>
    %30 = vector.shape_cast %29 : vector<1x128x128xbf16> to vector<128x128xbf16>
    %cst_23 = arith.constant dense<0.000000e+00> : vector<24x128xf32>
    %31 = tpu.matmul %28, %30, %cst_23 {dimension_numbers = #tpu.dot_dimension_numbers<[1], [0], [0], [1], [0, 0, 1, 1], [], []>} : vector<24x128xbf16>, vector<128x128xbf16>, vector<24x128xf32> -> vector<24x128xf32>
    %c4_24 = arith.constant 4 : index
    %c0_25 = arith.constant 0 : index
    %32 = vector.load %arg3[%c4_24, %c0_25] : memref<5x128xf32, #tpu.memory_space<vmem>>, vector<1x128xf32>
    %33 = vector.broadcast %32 : vector<1x128xf32> to vector<24x128xf32>
    %34 = arith.addf %31, %33 : vector<24x128xf32>
    %35 = arith.truncf %34 : vector<24x128xf32> to vector<24x128xbf16>
    %c0_26 = arith.constant 0 : index
    %c0_27 = arith.constant 0 : index
    %36 = vector.load %arg4[%c0_26, %c0_27] : memref<128x128xbf16, #tpu.memory_space<vmem>>, vector<128x128xbf16>
    %cst_28 = arith.constant dense<0.000000e+00> : vector<24x128xf32>
    %37 = tpu.matmul %35, %36, %cst_28 {dimension_numbers = #tpu.dot_dimension_numbers<[1], [0], [0], [1], [0, 0, 1, 1], [], []>} : vector<24x128xbf16>, vector<128x128xbf16>, vector<24x128xf32> -> vector<24x128xf32>
    %c0_29 = arith.constant 0 : index
    %c0_30 = arith.constant 0 : index
    %38 = vector.load %arg5[%c0_29, %c0_30] : memref<1x128xf32, #tpu.memory_space<vmem>>, vector<1x128xf32>
    %39 = vector.broadcast %38 : vector<1x128xf32> to vector<24x128xf32>
    %40 = arith.addf %37, %39 : vector<24x128xf32>
    %c0_31 = arith.constant 0 : index
    %c0_32 = arith.constant 0 : index
    %41 = vector.load %arg6[%c0_31, %c0_32] : memref<24x128xf32, #tpu.memory_space<vmem>>, vector<24x128xf32>
    tpu.vector_store %arg6[%c0_31, %c0_32], %40 {strides = array<i32>} : memref<24x128xf32, #tpu.memory_space<vmem>>, vector<24x128xf32>,
    return
  }
  func.func @transform_0(%arg0: i32) -> (i32, i32) {
    %c0_i32 = arith.constant 0 : i32
    %c0_i32_0 = arith.constant 0 : i32
    return %arg0, %c0_i32 : i32, i32
  }
  func.func @transform_1(%arg0: i32) -> (i32, i32, i32) {
    %c0_i32 = arith.constant 0 : i32
    %c0_i32_0 = arith.constant 0 : i32
    %c0_i32_1 = arith.constant 0 : i32
    %c0_i32_2 = arith.constant 0 : i32
    return %c0_i32, %c0_i32_0, %c0_i32_1 : i32, i32, i32
  }
  func.func @transform_2(%arg0: i32) -> (i32, i32) {
    %c0_i32 = arith.constant 0 : i32
    %c0_i32_0 = arith.constant 0 : i32
    %c0_i32_1 = arith.constant 0 : i32
    return %c0_i32, %c0_i32_0 : i32, i32
  }
  func.func @transform_3(%arg0: i32) -> (i32, i32) {
    %c0_i32 = arith.constant 0 : i32
    %c0_i32_0 = arith.constant 0 : i32
    %c0_i32_1 = arith.constant 0 : i32
    return %c0_i32, %c0_i32_0 : i32, i32
  }
  func.func @transform_4(%arg0: i32) -> (i32, i32) {
    %c0_i32 = arith.constant 0 : i32
    %c0_i32_0 = arith.constant 0 : i32
    %c0_i32_1 = arith.constant 0 : i32
    return %c0_i32, %c0_i32_0 : i32, i32
  }
  func.func @transform_5(%arg0: i32) -> (i32, i32) {
    %c0_i32 = arith.constant 0 : i32
    %c0_i32_0 = arith.constant 0 : i32
    return %arg0, %c0_i32 : i32, i32
  }
}

</mosaic_0001>

<llo_original>
// kernel: tpu_custom_call.1
$region0: #{tpu_custom_call.1}
  #allocation0 [shape = 'u32[]', space=smem, size = 0x4, offset = 0x4, fixed_abs, tag = 'smem constant byte address 0x4 - core index']
  #allocation1 [shape = 'u32[72,128]{1,0:T(1,128)}', space=vmem, size = 0x9000, scoped, tag = 'internal scratch']
  %s0 = inlined_call_operand.hbm [shape: bf16[24,128], index: 0, kind: input, shape index: {}]
  %s1 = inlined_call_operand.hbm [shape: bf16[5,128,128], index: 1, kind: input, shape index: {}]
  %s2 = inlined_call_operand.hbm [shape: f32[5,128], index: 2, kind: input, shape index: {}]
  %s3 = inlined_call_operand.hbm [shape: bf16[128,128], index: 3, kind: input, shape index: {}]
  %s4 = inlined_call_operand.vmem [shape: f32[1,128], index: 4, kind: input, shape index: {}]
  %s5 = inlined_call_operand.hbm [shape: f32[24,128], index: 5, kind: output, shape index: {}]
  %s6 = sld [smem:[#allocation0]]
  $region46: #{tpu_custom_call.1} parent=0
    _
  %s8 = ssub.s32 1, %s6
  %s9 = scalar_select 0, %s8, %s6
  $region1: #{tpu_custom_call.1} parent=0
    #allocation2 [shape = 'u8[6144]{0}', space=vmem, size = 0x1800, scoped, tag = 'input window, operand 0, single buffered']
    #allocation3 [shape = 's32[1]{0}', space=sflag, size = 0x4, scoped, tag = 'scoped memory for tpu_custom_call.1']
    #allocation4 [shape = 's32[1]{0}', space=sflag, size = 0x4, scoped, tag = 'scoped memory for tpu_custom_call.1']
    #allocation5 [shape = 'u8[163840]{0}', space=vmem, size = 0x28000, scoped, tag = 'input window, operand 1, single buffered']
    #allocation6 [shape = 's32[1]{0}', space=sflag, size = 0x4, scoped, tag = 'scoped memory for tpu_custom_call.1']
    #allocation7 [shape = 'u8[4096]{0}', space=vmem, size = 0x1000, scoped, tag = 'input window, operand 2, single buffered']
    #allocation8 [shape = 'u8[32768]{0}', space=vmem, size = 0x8000, scoped, tag = 'input window, operand 3, single buffered']
    #allocation9 [shape = 's32[1]{0}', space=sflag, size = 0x4, scoped, tag = 'scoped memory for tpu_custom_call.1']
    #allocation10 [shape = 'u8[12288]{0}', space=vmem, size = 0x3000, scoped, tag = 'output window, operand 0, single buffered']
    %10 = vsyncpa [#allocation3], 0
    %11 = vsyncpa [#allocation6], 0
    %12 = vsyncpa [#allocation9], 0
    %13 = vsyncpa [#allocation4], 0
    // Predicated region
    $region2: #{tpu_custom_call.1} parent=1 // pred_check
      _
    $region3: #{tpu_custom_call.1} parent=1 // pred_check_branch
      %15 = sbr.rel (0) target = $region5
    $region4: #{tpu_custom_call.1} parent=1 // pred_region
      %17 = vsyncadd [#allocation3], 0
      %s18 = sshll.u32 %s0, 4
      %s19 = int_to_ptr.hbm [resolvable:$true] %s18
      %s20 = sshll.u32 [#allocation2], 4
      %s21 = int_to_ptr.vmem [resolvable:$true] %s20
      %26 = dma.hbm_to_vmem [thread:$0]  %s19, 192, %s21, [#allocation3], 64, 64, 4
    $region5: #{tpu_custom_call.1} parent=1 // pred_fallthru
      _
    // Predicated region
    $region6: #{tpu_custom_call.1} parent=1 // pred_check
      _
    $region7: #{tpu_custom_call.1} parent=1 // pred_check_branch
      %28 = sbr.rel (0) target = $region9
    $region8: #{tpu_custom_call.1} parent=1 // pred_region
      %30 = vsyncadd [#allocation6], 0
      %s31 = sshll.u32 %s1, 4
      %s32 = int_to_ptr.hbm [resolvable:$true] %s31
      %s33 = sshll.u32 [#allocation5], 4
      %s34 = int_to_ptr.vmem [resolvable:$true] %s33
      %39 = dma.hbm_to_vmem [thread:$0]  %s32, 5120, %s34, [#allocation6], 64, 64, 4
    $region9: #{tpu_custom_call.1} parent=1 // pred_fallthru
      _
    // Predicated region
    $region10: #{tpu_custom_call.1} parent=1 // pred_check
      _
    $region11: #{tpu_custom_call.1} parent=1 // pred_check_branch
      %41 = sbr.rel (0) target = $region13
    $region12: #{tpu_custom_call.1} parent=1 // pred_region
      %43 = vsyncadd [#allocation6], 0
      %s45 = sshll.u32 %s2, 4
      %s46 = int_to_ptr.hbm [resolvable:$true] %s45
      %s47 = sshll.u32 [#allocation7], 4
      %s48 = int_to_ptr.vmem [resolvable:$true] %s47
      %50 = dma.hbm_to_vmem [thread:$0]  %s46, 128, %s48, [#allocation6]
    $region13: #{tpu_custom_call.1} parent=1 // pred_fallthru
      _
    // Predicated region
    $region14: #{tpu_custom_call.1} parent=1 // pred_check
      _
    $region15: #{tpu_custom_call.1} parent=1 // pred_check_branch
      %52 = sbr.rel (0) target = $region17
    $region16: #{tpu_custom_call.1} parent=1 // pred_region
      %54 = vsyncadd [#allocation9], 0
      %s55 = sshll.u32 %s3, 4
      %s56 = int_to_ptr.hbm [resolvable:$true] %s55
      %s57 = sshll.u32 [#allocation8], 4
      %s58 = int_to_ptr.vmem [resolvable:$true] %s57
      %63 = dma.hbm_to_vmem [thread:$0]  %s56, 1024, %s58, [#allocation9], 64, 64, 4
    $region17: #{tpu_custom_call.1} parent=1 // pred_fallthru
      _
    // Predicated region
    $region18: #{tpu_custom_call.1} parent=1 // pred_check
      _
    $region19: #{tpu_custom_call.1} parent=1 // pred_check_branch
      %65 = sbr.rel (0) target = $region21
    $region20: #{tpu_custom_call.1} parent=1 // pred_region
      _
    $region21: #{tpu_custom_call.1} parent=1 // pred_fallthru
      _
    // Predicated region
    $region22: #{tpu_custom_call.1} parent=1 // pred_check
      _
    $region23: #{tpu_custom_call.1} parent=1 // pred_check_branch
      %67 = sbr.rel (0) target = $region25
    $region24: #{tpu_custom_call.1} parent=1 // pred_region
      %69 = dma.done [#allocation3], 192
    $region25: #{tpu_custom_call.1} parent=1 // pred_fallthru
      _
    // Predicated region
    $region26: #{tpu_custom_call.1} parent=1 // pred_check
      _
    $region27: #{tpu_custom_call.1} parent=1 // pred_check_branch
      %71 = sbr.rel (0) target = $region29
    $region28: #{tpu_custom_call.1} parent=1 // pred_region
      %73 = dma.done [#allocation6], 5120
    $region29: #{tpu_custom_call.1} parent=1 // pred_fallthru
      _
    // Predicated region
    $region30: #{tpu_custom_call.1} parent=1 // pred_check
      _
    $region31: #{tpu_custom_call.1} parent=1 // pred_check_branch
      %75 = sbr.rel (0) target = $region33
    $region32: #{tpu_custom_call.1} parent=1 // pred_region
      %77 = dma.done [#allocation6], 128
    $region33: #{tpu_custom_call.1} parent=1 // pred_fallthru
      _
    // Predicated region
    $region34: #{tpu_custom_call.1} parent=1 // pred_check
      _
    $region35: #{tpu_custom_call.1} parent=1 // pred_check_branch
      %79 = sbr.rel (0) target = $region37
    $region36: #{tpu_custom_call.1} parent=1 // pred_region
      %81 = dma.done [#allocation9], 1024
    $region37: #{tpu_custom_call.1} parent=1 // pred_fallthru
      _
    %v82 = vld [vmem:[#allocation2] sm:$0xf]
    %v83 = vld [vmem:[#allocation2 + $0x4] sm:$0xf]
    %v84 = vld [vmem:[#allocation2 + $0x8] sm:$0xf]
    %v85 = vld [vmem:[#allocation5] sm:$0xf]
    %v86 = vld [vmem:[#allocation5 + $0x4] sm:$0xf]
    %v87 = vld [vmem:[#allocation5 + $0x8] sm:$0xf]
    %v88 = vld [vmem:[#allocation5 + $0xc] sm:$0xf]
    %v89 = vld [vmem:[#allocation5 + $0x10] sm:$0xf]
    %v90 = vld [vmem:[#allocation5 + $0x14] sm:$0xf]
    %v91 = vld [vmem:[#allocation5 + $0x18] sm:$0xf]
    %v92 = vld [vmem:[#allocation5 + $0x1c] sm:$0xf]
    %v93 = vld [vmem:[#allocation5 + $0x20] sm:$0xf]
    %v94 = vld [vmem:[#allocation5 + $0x24] sm:$0xf]
    %v95 = vld [vmem:[#allocation5 + $0x28] sm:$0xf]
    %v96 = vld [vmem:[#allocation5 + $0x2c] sm:$0xf]
    %v97 = vld [vmem:[#allocation5 + $0x30] sm:$0xf]
    %v98 = vld [vmem:[#allocation5 + $0x34] sm:$0xf]
    %v99 = vld [vmem:[#allocation5 + $0x38] sm:$0xf]
    %v100 = vld [vmem:[#allocation5 + $0x3c] sm:$0xf]
    %v101 = vld [vmem:[#allocation7] sm:$0x1]
    %v102 = vperm.slane %v101, 0
    %v106 = vunpack.c.l.b16 %v82
    %v107 = vunpack.c.l.b16 %v83
    %v108 = vunpack.c.l.b16 %v84
    %v109 = vpack.c.b16 %v107, %v106
    %v110 = vpack.c.b16 %v108, %v108
    %v129 = vunpack.c.l.b16 %v85
    %v130 = vunpack.c.l.b16 %v86
    %v131 = vunpack.c.l.b16 %v87
    %v132 = vunpack.c.l.b16 %v88
    %v133 = vunpack.c.l.b16 %v89
    %v134 = vunpack.c.l.b16 %v90
    %v135 = vunpack.c.l.b16 %v91
    %v136 = vunpack.c.l.b16 %v92
    %v137 = vunpack.c.l.b16 %v93
    %v138 = vunpack.c.l.b16 %v94
    %v139 = vunpack.c.l.b16 %v95
    %v140 = vunpack.c.l.b16 %v96
    %v141 = vunpack.c.l.b16 %v97
    %v142 = vunpack.c.l.b16 %v98
    %v143 = vunpack.c.l.b16 %v99
    %v144 = vunpack.c.l.b16 %v100
    %v145 = vpack.c.b16 %v130, %v129
    %v146 = vpack.c.b16 %v132, %v131
    %v147 = vpack.c.b16 %v134, %v133
    %v148 = vpack.c.b16 %v136, %v135
    %v149 = vpack.c.b16 %v138, %v137
    %v150 = vpack.c.b16 %v140, %v139
    %v151 = vpack.c.b16 %v142, %v141
    %v152 = vpack.c.b16 %v144, %v143
    %161 = vmatpush.bf16.msra.mxu0 %v152
    %162 = vmatpush.bf16.msra.mxu0 %v151
    %163 = vmatpush.bf16.msra.mxu0 %v150
    %164 = vmatpush.bf16.msra.mxu0 %v149
    %165 = vmatpush.bf16.msra.mxu0 %v148
    %166 = vmatpush.bf16.msra.mxu0 %v147
    %167 = vmatpush.bf16.msra.mxu0 %v146
    %168 = vmatpush.bf16.msra.mxu0 %v145
    %169 = vmatmul.bf16.gmra.mxu0 %v109
    %v170 = vpop.f32.mrf.mxu0
    %v171 = vadd.f32 %v102, %v170
    %v172 = vpop.f32.mrf.mxu0
    %v173 = vadd.f32 %v102, %v172
    %174 = vmatmul.bf16.gmra.mxu0 %v110
    %v175 = vpop.f32.mrf.mxu0
    %v176 = vadd.f32 %v102, %v175
    %v177 = vpop.f32.mrf.mxu0
    %178 = vdwg.mxu0
    %v179 = vpack.c.bf16 %v173, %v171
    %v180 = vpack.c.bf16 %v176, %v176
    %s181 = scalar_lea.vmem [#allocation5], 64
    %v182 = vld [vmem:[%s181] sm:$0xf]
    %v183 = vld [vmem:[%s181 + $0x4] sm:$0xf]
    %v184 = vld [vmem:[%s181 + $0x8] sm:$0xf]
    %v185 = vld [vmem:[%s181 + $0xc] sm:$0xf]
    %v186 = vld [vmem:[%s181 + $0x10] sm:$0xf]
    %v187 = vld [vmem:[%s181 + $0x14] sm:$0xf]
    %v188 = vld [vmem:[%s181 + $0x18] sm:$0xf]
    %v189 = vld [vmem:[%s181 + $0x1c] sm:$0xf]
    %v190 = vld [vmem:[%s181 + $0x20] sm:$0xf]
    %v191 = vld [vmem:[%s181 + $0x24] sm:$0xf]
    %v192 = vld [vmem:[%s181 + $0x28] sm:$0xf]
    %v193 = vld [vmem:[%s181 + $0x2c] sm:$0xf]
    %v194 = vld [vmem:[%s181 + $0x30] sm:$0xf]
    %v195 = vld [vmem:[%s181 + $0x34] sm:$0xf]
    %v196 = vld [vmem:[%s181 + $0x38] sm:$0xf]
    %v197 = vld [vmem:[%s181 + $0x3c] sm:$0xf]
    %v198 = vld [vmem:[#allocation7 + $0x1] sm:$0x1]
    %v199 = vperm.slane %v198, 0
    %v216 = vunpack.c.l.b16 %v182
    %v217 = vunpack.c.l.b16 %v183
    %v218 = vunpack.c.l.b16 %v184
    %v219 = vunpack.c.l.b16 %v185
    %v220 = vunpack.c.l.b16 %v186
    %v221 = vunpack.c.l.b16 %v187
    %v222 = vunpack.c.l.b16 %v188
    %v223 = vunpack.c.l.b16 %v189
    %v224 = vunpack.c.l.b16 %v190
    %v225 = vunpack.c.l.b16 %v191
    %v226 = vunpack.c.l.b16 %v192
    %v227 = vunpack.c.l.b16 %v193
    %v228 = vunpack.c.l.b16 %v194
    %v229 = vunpack.c.l.b16 %v195
    %v230 = vunpack.c.l.b16 %v196
    %v231 = vunpack.c.l.b16 %v197
    %v232 = vpack.c.b16 %v217, %v216
    %v233 = vpack.c.b16 %v219, %v218
    %v234 = vpack.c.b16 %v221, %v220
    %v235 = vpack.c.b16 %v223, %v222
    %v236 = vpack.c.b16 %v225, %v224
    %v237 = vpack.c.b16 %v227, %v226
    %v238 = vpack.c.b16 %v229, %v228
    %v239 = vpack.c.b16 %v231, %v230
    %248 = vmatpush.bf16.msra.mxu0 %v239
    %249 = vmatpush.bf16.msra.mxu0 %v238
    %250 = vmatpush.bf16.msra.mxu0 %v237
    %251 = vmatpush.bf16.msra.mxu0 %v236
    %252 = vmatpush.bf16.msra.mxu0 %v235
    %253 = vmatpush.bf16.msra.mxu0 %v234
    %254 = vmatpush.bf16.msra.mxu0 %v233
    %255 = vmatpush.bf16.msra.mxu0 %v232
    %256 = vmatmul.bf16.gmra.mxu0 %v179
    %v257 = vpop.f32.mrf.mxu0
    %v258 = vadd.f32 %v199, %v257
    %v259 = vpop.f32.mrf.mxu0
    %v260 = vadd.f32 %v199, %v259
    %261 = vmatmul.bf16.gmra.mxu0 %v180
    %v262 = vpop.f32.mrf.mxu0
    %v263 = vadd.f32 %v199, %v262
    %v264 = vpop.f32.mrf.mxu0
    %265 = vdwg.mxu0
    %v266 = vpack.c.bf16 %v260, %v258
    %v267 = vpack.c.bf16 %v263, %v263
    %s268 = scalar_lea.vmem [#allocation5], 128
    %v269 = vld [vmem:[%s268] sm:$0xf]
    %v270 = vld [vmem:[%s268 + $0x4] sm:$0xf]
    %v271 = vld [vmem:[%s268 + $0x8] sm:$0xf]
    %v272 = vld [vmem:[%s268 + $0xc] sm:$0xf]
    %v273 = vld [vmem:[%s268 + $0x10] sm:$0xf]
    %v274 = vld [vmem:[%s268 + $0x14] sm:$0xf]
    %v275 = vld [vmem:[%s268 + $0x18] sm:$0xf]
    %v276 = vld [vmem:[%s268 + $0x1c] sm:$0xf]
    %v277 = vld [vmem:[%s268 + $0x20] sm:$0xf]
    %v278 = vld [vmem:[%s268 + $0x24] sm:$0xf]
    %v279 = vld [vmem:[%s268 + $0x28] sm:$0xf]
    %v280 = vld [vmem:[%s268 + $0x2c] sm:$0xf]
    %v281 = vld [vmem:[%s268 + $0x30] sm:$0xf]
    %v282 = vld [vmem:[%s268 + $0x34] sm:$0xf]
    %v283 = vld [vmem:[%s268 + $0x38] sm:$0xf]
    %v284 = vld [vmem:[%s268 + $0x3c] sm:$0xf]
    %v285 = vld [vmem:[#allocation7 + $0x2] sm:$0x1]
    %v286 = vperm.slane %v285, 0
    %v303 = vunpack.c.l.b16 %v269
    %v304 = vunpack.c.l.b16 %v270
    %v305 = vunpack.c.l.b16 %v271
    %v306 = vunpack.c.l.b16 %v272
    %v307 = vunpack.c.l.b16 %v273
    %v308 = vunpack.c.l.b16 %v274
    %v309 = vunpack.c.l.b16 %v275
    %v310 = vunpack.c.l.b16 %v276
    %v311 = vunpack.c.l.b16 %v277
    %v312 = vunpack.c.l.b16 %v278
    %v313 = vunpack.c.l.b16 %v279
    %v314 = vunpack.c.l.b16 %v280
    %v315 = vunpack.c.l.b16 %v281
    %v316 = vunpack.c.l.b16 %v282
    %v317 = vunpack.c.l.b16 %v283
    %v318 = vunpack.c.l.b16 %v284
    %v319 = vpack.c.b16 %v304, %v303
    %v320 = vpack.c.b16 %v306, %v305
    %v321 = vpack.c.b16 %v308, %v307
    %v322 = vpack.c.b16 %v310, %v309
    %v323 = vpack.c.b16 %v312, %v311
    %v324 = vpack.c.b16 %v314, %v313
    %v325 = vpack.c.b16 %v316, %v315
    %v326 = vpack.c.b16 %v318, %v317
    %335 = vmatpush.bf16.msra.mxu0 %v326
    %336 = vmatpush.bf16.msra.mxu0 %v325
    %337 = vmatpush.bf16.msra.mxu0 %v324
    %338 = vmatpush.bf16.msra.mxu0 %v323
    %339 = vmatpush.bf16.msra.mxu0 %v322
    %340 = vmatpush.bf16.msra.mxu0 %v321
    %341 = vmatpush.bf16.msra.mxu0 %v320
    %342 = vmatpush.bf16.msra.mxu0 %v319
    %343 = vmatmul.bf16.gmra.mxu0 %v266
    %v344 = vpop.f32.mrf.mxu0
    %v345 = vadd.f32 %v286, %v344
    %v346 = vpop.f32.mrf.mxu0
    %v347 = vadd.f32 %v286, %v346
    %348 = vmatmul.bf16.gmra.mxu0 %v267
    %v349 = vpop.f32.mrf.mxu0
    %v350 = vadd.f32 %v286, %v349
    %v351 = vpop.f32.mrf.mxu0
    %352 = vdwg.mxu0
    %v353 = vpack.c.bf16 %v347, %v345
    %v354 = vpack.c.bf16 %v350, %v350
    %s355 = scalar_lea.vmem [#allocation5], 192
    %v356 = vld [vmem:[%s355] sm:$0xf]
    %v357 = vld [vmem:[%s355 + $0x4] sm:$0xf]
    %v358 = vld [vmem:[%s355 + $0x8] sm:$0xf]
    %v359 = vld [vmem:[%s355 + $0xc] sm:$0xf]
    %v360 = vld [vmem:[%s355 + $0x10] sm:$0xf]
    %v361 = vld [vmem:[%s355 + $0x14] sm:$0xf]
    %v362 = vld [vmem:[%s355 + $0x18] sm:$0xf]
    %v363 = vld [vmem:[%s355 + $0x1c] sm:$0xf]
    %v364 = vld [vmem:[%s355 + $0x20] sm:$0xf]
    %v365 = vld [vmem:[%s355 + $0x24] sm:$0xf]
    %v366 = vld [vmem:[%s355 + $0x28] sm:$0xf]
    %v367 = vld [vmem:[%s355 + $0x2c] sm:$0xf]
    %v368 = vld [vmem:[%s355 + $0x30] sm:$0xf]
    %v369 = vld [vmem:[%s355 + $0x34] sm:$0xf]
    %v370 = vld [vmem:[%s355 + $0x38] sm:$0xf]
    %v371 = vld [vmem:[%s355 + $0x3c] sm:$0xf]
    %v372 = vld [vmem:[#allocation7 + $0x3] sm:$0x1]
    %v373 = vperm.slane %v372, 0
    %v390 = vunpack.c.l.b16 %v356
    %v391 = vunpack.c.l.b16 %v357
    %v392 = vunpack.c.l.b16 %v358
    %v393 = vunpack.c.l.b16 %v359
    %v394 = vunpack.c.l.b16 %v360
    %v395 = vunpack.c.l.b16 %v361
    %v396 = vunpack.c.l.b16 %v362
    %v397 = vunpack.c.l.b16 %v363
    %v398 = vunpack.c.l.b16 %v364
    %v399 = vunpack.c.l.b16 %v365
    %v400 = vunpack.c.l.b16 %v366
    %v401 = vunpack.c.l.b16 %v367
    %v402 = vunpack.c.l.b16 %v368
    %v403 = vunpack.c.l.b16 %v369
    %v404 = vunpack.c.l.b16 %v370
    %v405 = vunpack.c.l.b16 %v371
    %v406 = vpack.c.b16 %v391, %v390
    %v407 = vpack.c.b16 %v393, %v392
    %v408 = vpack.c.b16 %v395, %v394
    %v409 = vpack.c.b16 %v397, %v396
    %v410 = vpack.c.b16 %v399, %v398
    %v411 = vpack.c.b16 %v401, %v400
    %v412 = vpack.c.b16 %v403, %v402
    %v413 = vpack.c.b16 %v405, %v404
    %422 = vmatpush.bf16.msra.mxu0 %v413
    %423 = vmatpush.bf16.msra.mxu0 %v412
    %424 = vmatpush.bf16.msra.mxu0 %v411
    %425 = vmatpush.bf16.msra.mxu0 %v410
    %426 = vmatpush.bf16.msra.mxu0 %v409
    %427 = vmatpush.bf16.msra.mxu0 %v408
    %428 = vmatpush.bf16.msra.mxu0 %v407
    %429 = vmatpush.bf16.msra.mxu0 %v406
    %430 = vmatmul.bf16.gmra.mxu0 %v353
    %v431 = vpop.f32.mrf.mxu0
    %v432 = vadd.f32 %v373, %v431
    %v433 = vpop.f32.mrf.mxu0
    %v434 = vadd.f32 %v373, %v433
    %435 = vmatmul.bf16.gmra.mxu0 %v354
    %v436 = vpop.f32.mrf.mxu0
    %v437 = vadd.f32 %v373, %v436
    %v438 = vpop.f32.mrf.mxu0
    %439 = vdwg.mxu0
    %v440 = vpack.c.bf16 %v434, %v432
    %v441 = vpack.c.bf16 %v437, %v437
    %s442 = scalar_lea.vmem [#allocation5], 256
    %v443 = vld [vmem:[%s442] sm:$0xf]
    %v444 = vld [vmem:[%s442 + $0x4] sm:$0xf]
    %v445 = vld [vmem:[%s442 + $0x8] sm:$0xf]
    %v446 = vld [vmem:[%s442 + $0xc] sm:$0xf]
    %v447 = vld [vmem:[%s442 + $0x10] sm:$0xf]
    %v448 = vld [vmem:[%s442 + $0x14] sm:$0xf]
    %v449 = vld [vmem:[%s442 + $0x18] sm:$0xf]
    %v450 = vld [vmem:[%s442 + $0x1c] sm:$0xf]
    %v451 = vld [vmem:[%s442 + $0x20] sm:$0xf]
    %v452 = vld [vmem:[%s442 + $0x24] sm:$0xf]
    %v453 = vld [vmem:[%s442 + $0x28] sm:$0xf]
    %v454 = vld [vmem:[%s442 + $0x2c] sm:$0xf]
    %v455 = vld [vmem:[%s442 + $0x30] sm:$0xf]
    %v456 = vld [vmem:[%s442 + $0x34] sm:$0xf]
    %v457 = vld [vmem:[%s442 + $0x38] sm:$0xf]
    %v458 = vld [vmem:[%s442 + $0x3c] sm:$0xf]
    %v459 = vld [vmem:[#allocation7 + $0x4] sm:$0x1]
    %v460 = vperm.slane %v459, 0
    %v477 = vunpack.c.l.b16 %v443
    %v478 = vunpack.c.l.b16 %v444
    %v479 = vunpack.c.l.b16 %v445
    %v480 = vunpack.c.l.b16 %v446
    %v481 = vunpack.c.l.b16 %v447
    %v482 = vunpack.c.l.b16 %v448
    %v483 = vunpack.c.l.b16 %v449
    %v484 = vunpack.c.l.b16 %v450
    %v485 = vunpack.c.l.b16 %v451
    %v486 = vunpack.c.l.b16 %v452
    %v487 = vunpack.c.l.b16 %v453
    %v488 = vunpack.c.l.b16 %v454
    %v489 = vunpack.c.l.b16 %v455
    %v490 = vunpack.c.l.b16 %v456
    %v491 = vunpack.c.l.b16 %v457
    %v492 = vunpack.c.l.b16 %v458
    %v493 = vpack.c.b16 %v478, %v477
    %v494 = vpack.c.b16 %v480, %v479
    %v495 = vpack.c.b16 %v482, %v481
    %v496 = vpack.c.b16 %v484, %v483
    %v497 = vpack.c.b16 %v486, %v485
    %v498 = vpack.c.b16 %v488, %v487
    %v499 = vpack.c.b16 %v490, %v489
    %v500 = vpack.c.b16 %v492, %v491
    %509 = vmatpush.bf16.msra.mxu0 %v500
    %510 = vmatpush.bf16.msra.mxu0 %v499
    %511 = vmatpush.bf16.msra.mxu0 %v498
    %512 = vmatpush.bf16.msra.mxu0 %v497
    %513 = vmatpush.bf16.msra.mxu0 %v496
    %514 = vmatpush.bf16.msra.mxu0 %v495
    %515 = vmatpush.bf16.msra.mxu0 %v494
    %516 = vmatpush.bf16.msra.mxu0 %v493
    %517 = vmatmul.bf16.gmra.mxu0 %v440
    %v518 = vpop.f32.mrf.mxu0
    %v519 = vadd.f32 %v460, %v518
    %v520 = vpop.f32.mrf.mxu0
    %v521 = vadd.f32 %v460, %v520
    %522 = vmatmul.bf16.gmra.mxu0 %v441
    %v523 = vpop.f32.mrf.mxu0
    %v524 = vadd.f32 %v460, %v523
    %v525 = vpop.f32.mrf.mxu0
    %526 = vdwg.mxu0
    %v527 = vpack.c.bf16 %v521, %v519
    %v528 = vpack.c.bf16 %v524, %v524
    %v529 = vld [vmem:[#allocation8] sm:$0xf]
    %v530 = vld [vmem:[#allocation8 + $0x4] sm:$0xf]
    %v531 = vld [vmem:[#allocation8 + $0x8] sm:$0xf]
    %v532 = vld [vmem:[#allocation8 + $0xc] sm:$0xf]
    %v533 = vld [vmem:[#allocation8 + $0x10] sm:$0xf]
    %v534 = vld [vmem:[#allocation8 + $0x14] sm:$0xf]
    %v535 = vld [vmem:[#allocation8 + $0x18] sm:$0xf]
    %v536 = vld [vmem:[#allocation8 + $0x1c] sm:$0xf]
    %v537 = vld [vmem:[#allocation8 + $0x20] sm:$0xf]
    %v538 = vld [vmem:[#allocation8 + $0x24] sm:$0xf]
    %v539 = vld [vmem:[#allocation8 + $0x28] sm:$0xf]
    %v540 = vld [vmem:[#allocation8 + $0x2c] sm:$0xf]
    %v541 = vld [vmem:[#allocation8 + $0x30] sm:$0xf]
    %v542 = vld [vmem:[#allocation8 + $0x34] sm:$0xf]
    %v543 = vld [vmem:[#allocation8 + $0x38] sm:$0xf]
    %v544 = vld [vmem:[#allocation8 + $0x3c] sm:$0xf]
    %v545 = vld [vmem:[%s4] sm:$0x1]
    %v547 = vperm.slane %v545, 0
    %v565 = vunpack.c.l.b16 %v529
    %v566 = vunpack.c.l.b16 %v530
    %v567 = vunpack.c.l.b16 %v531
    %v568 = vunpack.c.l.b16 %v532
    %v569 = vunpack.c.l.b16 %v533
    %v570 = vunpack.c.l.b16 %v534
    %v571 = vunpack.c.l.b16 %v535
    %v572 = vunpack.c.l.b16 %v536
    %v573 = vunpack.c.l.b16 %v537
    %v574 = vunpack.c.l.b16 %v538
    %v575 = vunpack.c.l.b16 %v539
    %v576 = vunpack.c.l.b16 %v540
    %v577 = vunpack.c.l.b16 %v541
    %v578 = vunpack.c.l.b16 %v542
    %v579 = vunpack.c.l.b16 %v543
    %v580 = vunpack.c.l.b16 %v544
    %v581 = vpack.c.b16 %v566, %v565
    %v582 = vpack.c.b16 %v568, %v567
    %v583 = vpack.c.b16 %v570, %v569
    %v584 = vpack.c.b16 %v572, %v571
    %v585 = vpack.c.b16 %v574, %v573
    %v586 = vpack.c.b16 %v576, %v575
    %v587 = vpack.c.b16 %v578, %v577
    %v588 = vpack.c.b16 %v580, %v579
    %597 = vmatpush.bf16.msra.mxu0 %v588
    %598 = vmatpush.bf16.msra.mxu0 %v587
    %599 = vmatpush.bf16.msra.mxu0 %v586
    %600 = vmatpush.bf16.msra.mxu0 %v585
    %601 = vmatpush.bf16.msra.mxu0 %v584
    %602 = vmatpush.bf16.msra.mxu0 %v583
    %603 = vmatpush.bf16.msra.mxu0 %v582
    %604 = vmatpush.bf16.msra.mxu0 %v581
    %605 = vmatmul.bf16.gmra.mxu0 %v527
    %v606 = vpop.f32.mrf.mxu0
    %v607 = vadd.f32 %v547, %v606
    %v608 = vpop.f32.mrf.mxu0
    %v609 = vadd.f32 %v547, %v608
    %610 = vmatmul.bf16.gmra.mxu0 %v528
    %v611 = vpop.f32.mrf.mxu0
    %v612 = vadd.f32 %v547, %v611
    %v613 = vpop.f32.mrf.mxu0
    %614 = vdwg.mxu0
    %615 = vst [vmem:[#allocation10] sm:$0xff] %v607
    %616 = vst [vmem:[#allocation10 + $0x8] sm:$0xff] %v609
    %617 = vst [vmem:[#allocation10 + $0x10] sm:$0xff] %v612
    // Predicated region
    $region38: #{tpu_custom_call.1} parent=1 // pred_check
      _
    $region39: #{tpu_custom_call.1} parent=1 // pred_check_branch
      %619 = sbr.rel (0) target = $region41
    $region40: #{tpu_custom_call.1} parent=1 // pred_region
      %621 = vsyncadd [#allocation4], 0
      %s622 = sshll.u32 [#allocation10], 4
      %s623 = int_to_ptr.vmem [resolvable:$true] %s622
      %s624 = sshll.u32 %s5, 4
      %s625 = int_to_ptr.hbm [resolvable:$true] %s624
      %630 = dma.vmem_to_hbm [thread:$0]  %s623, 384, %s625, [#allocation4], 128, 128, 8
    $region41: #{tpu_custom_call.1} parent=1 // pred_fallthru
      _
    // Predicated region
    $region42: #{tpu_custom_call.1} parent=1 // pred_check
      _
    $region43: #{tpu_custom_call.1} parent=1 // pred_check_branch
      %632 = sbr.rel (0) target = $region45
    $region44: #{tpu_custom_call.1} parent=1 // pred_region
      %634 = dma.done [#allocation4], 384
    $region45: #{tpu_custom_call.1} parent=1 // pred_fallthru
      _
    %635 = vsyncpa [#allocation3], 1
    %636 = vsyncpa [#allocation6], 1
    %637 = vsyncpa [#allocation9], 1
    %638 = vsyncpa [#allocation4], 1

</llo_original>
